<compile_context>
chip_gen: v5e
topology: v5e:2x2
jax: 0.10.0
libtpu: 0.0.40
codegen_flags: <defaults>
</compile_context>

<pallas_src>
import functools

import jax
import jax.numpy as jnp
from jax.experimental import pallas as pl
from jax.experimental.pallas import tpu as pltpu


# ----------------------------------------------------------------------------
# Fused kernel: trunk MLP (Linear -> ReLU -> ... -> Linear) + log_std squash.
# refs = (obs_ref, W0, b0, W1, b1, ..., W_last, b_last, out_ref)
# obs_ref / out_ref are (TB, *) row tiles; weights are full-array VMEM refs.
# Last layer's columns are [mu (A) | log_std (A) | zero pad up to 128].
# ----------------------------------------------------------------------------
def _actor_trunk_kernel(*refs, action_dim, log_std_min, log_std_max,
                        bf16_activations):
    obs_ref = refs[0]
    o_ref = refs[-1]
    wb = refs[1:-1]
    n_layers = len(wb) // 2

    x = obs_ref[...]                                     # f32 (TB, F_pad)
    if bf16_activations:
        x = x.astype(jnp.bfloat16)                       # cast once (v6e/v7x)

    for i in range(n_layers):
        w = wb[2 * i][...]                               # bf16 (in, out)
        b = wb[2 * i + 1][...]                           # f32  (1, out)
        lhs = x if bf16_activations else x.astype(jnp.bfloat16)
        acc = jnp.dot(lhs, w, preferred_element_type=jnp.float32) + b
        if i < n_layers - 1:                             # ReLU on hidden layers
            if bf16_activations:
                x = jnp.maximum(acc, 0.0).astype(jnp.bfloat16)
            else:
                x = jnp.maximum(acc, 0.0)                # v5e: f32 elementwise
        else:
            x = acc                                      # final layer stays f32

    # x: (TB, out_pad) f32;  lanes [0:A] = mu, [A:2A] = log_std, rest = pad.
    log_std = jnp.tanh(x)
    log_std = log_std_min + 0.5 * (log_std_max - log_std_min) * (log_std + 1.0)
    std = jnp.exp(log_std)

    lane = jax.lax.broadcasted_iota(jnp.int32, x.shape, dimension=1)
    # mu lanes pass through raw; everything else gets the std transform.
    o_ref[...] = jnp.where(lane < action_dim, x, std)


# ----------------------------------------------------------------------------
# Wrapper: one pallas_call for the whole forward pass (post-encoder),
# batch-gridded over rows, weights resident in VMEM for the whole call.
# ----------------------------------------------------------------------------
def actor_forward(params, obs, *, action_dim, log_std_bounds, block_b=128,
                  bf16_activations=None):
    """Returns (mu, std) — the parameters of the SquashedNormal policy.

    # TODO(synk): utils.SquashedNormal is a torch.distributions object;
    # sampling / log_prob are host-side and not part of the kernel.
    """
    if bf16_activations is None:
        try:
            kind = jax.devices()[0].device_kind.lower()
        except Exception:
            kind = ""
        # v5e has no bf16 VPU/EUP: keep f32 elementwise there.
        bf16_activations = "v5" not in kind

    B = obs.shape[0]
    trunk = params["trunk"]
    wb_flat = []
    for w, b in trunk:
        wb_flat += [w, b]
    feat_pad = trunk[0][0].shape[0]      # K of first layer (padded to 128)
    out_pad = trunk[-1][0].shape[1]      # lane-dense padded output width

    # Zero-pad obs columns to the (padded) first-layer K dim — exact no-op.
    if obs.shape[1] < feat_pad:
        obs = jnp.pad(obs, ((0, 0), (0, feat_pad - obs.shape[1])))

    # Row tile & batch padding (multiple of the tile; tile kept sublane-aligned).
    tb = block_b if B >= block_b else max(8, pl.cdiv(B, 8) * 8)
    b_pad = pl.cdiv(B, tb) * tb
    if b_pad > B:
        obs = jnp.pad(obs, ((0, b_pad - B), (0, 0)))

    kernel = functools.partial(
        _actor_trunk_kernel,
        action_dim=int(action_dim),
        log_std_min=float(log_std_bounds[0]),
        log_std_max=float(log_std_bounds[1]),
        bf16_activations=bool(bf16_activations),
    )

    # Advisory cost estimate so XLA can overlap this cheap call.
    flops = 0
    bytes_w = 0
    for w, b in trunk:
        flops += 2 * b_pad * w.shape[0] * w.shape[1]
        bytes_w += w.size * w.dtype.itemsize + b.size * b.dtype.itemsize
    cost = pl.CostEstimate(
        flops=int(flops),
        transcendentals=int(2 * b_pad * out_pad),            # tanh + exp
        bytes_accessed=int(bytes_w + b_pad * feat_pad * 4 + b_pad * out_pad * 4),
    )

    grid = (b_pad // tb,)
    obs_spec = pl.BlockSpec((tb, feat_pad), lambda i: (i, 0))
    out_spec = pl.BlockSpec((tb, out_pad), lambda i: (i, 0))
    # Weights/biases: full-array VMEM residents, DMA'd once per call.
    w_specs = [pl.BlockSpec(memory_space=pltpu.MemorySpace.VMEM)] * len(wb_flat)

    out = pl.pallas_call(
        kernel,
        out_shape=jax.ShapeDtypeStruct((b_pad, out_pad), jnp.float32),
        grid=grid,
        in_specs=[obs_spec] + w_specs,
        out_specs=out_spec,
        compiler_params=pltpu.CompilerParams(
            dimension_semantics=("parallel",)),
        cost_estimate=cost,
    )(obs, *wb_flat)

    mu = out[:B, :action_dim]
    std = out[:B, action_dim:2 * action_dim]
    return mu, std


# ----------------------------------------------------------------------------
# Parameter construction (deterministic, synthetic) matching
# utils.mlp(feature_dim, hidden_dim, 2*action_dim, hidden_depth).
# Weights stored [in, out] (transpose of torch's [out, in]) in bf16; biases f32.
# First layer's input rows zero-padded to `feat_pad` (lane-dense K) and final
# layer's output columns zero-padded to `out_pad` (lane-dense store).
# ----------------------------------------------------------------------------
def init_params(key, feature_dim, action_dim, hidden_dim, hidden_depth,
                feat_pad=128, out_pad=128):
    out_dim = 2 * action_dim
    out_pad = max(out_pad, out_dim)
    feat_pad = max(feat_pad, feature_dim)
    if hidden_depth == 0:
        dims = [(feature_dim, out_dim)]
    else:
        dims = [(feature_dim, hidden_dim)]
        dims += [(hidden_dim, hidden_dim)] * (hidden_depth - 1)
        dims += [(hidden_dim, out_dim)]

    scale = 0.1
    keys = jax.random.split(key, len(dims))
    trunk = []
    for i, (k, (fan_in, fan_out)) in enumerate(zip(keys, dims)):
        kw, kb = jax.random.split(k)
        w = scale * jax.random.normal(kw, (fan_in, fan_out), jnp.float32)
        b = scale * jax.random.normal(kb, (1, fan_out), jnp.float32)
        if i == 0:                      # pad K (input rows) to feat_pad — no-op
            w = jnp.pad(w, ((0, feat_pad - fan_in), (0, 0)))
        if i == len(dims) - 1:          # pad final output columns to out_pad
            w = jnp.pad(w, ((0, 0), (0, out_pad - fan_out)))
            b = jnp.pad(b, ((0, 0), (0, out_pad - fan_out)))
        trunk.append((w.astype(jnp.bfloat16), b.astype(jnp.float32)))
    return {"trunk": trunk}


if __name__ == "__main__":
    # Perf review: batch to >=128/256 rows so the MXU M dim is filled and the
    # launch overhead / weight DMA is amortized (grid=(2,) parallel on v7x).
    B = 256
    feature_dim = 64       # encoder.feature_dim (padded to 128 for lane-dense K)
    hidden_dim = 128
    hidden_depth = 2
    action_dim = 6         # action_shape = (6,)
    log_std_bounds = (-10.0, 2.0)

    key = jax.random.PRNGKey(0)
    kp, ko = jax.random.split(key)
    params = init_params(kp, feature_dim, action_dim, hidden_dim, hidden_depth)

    # TODO(synk): self.encoder is hydra-instantiated from an external config
    # not included in the spec; `obs` here stands in for the encoder's feature
    # output of shape [B, encoder.feature_dim].
    obs = jax.random.normal(ko, (B, feature_dim), jnp.float32)

    fwd = jax.jit(functools.partial(actor_forward, action_dim=action_dim,
                                    log_std_bounds=log_std_bounds))
    mu, std = fwd(params, obs)
    jax.block_until_ready((mu, std))

    assert mu.shape == (B, action_dim)
    assert std.shape == (B, action_dim)
    assert bool(jnp.all(jnp.isfinite(mu)))
    assert bool(jnp.all(std > 0.0))
    # std must lie inside exp([log_std_min, log_std_max]).
    assert bool(jnp.all(std <= jnp.exp(jnp.float32(log_std_bounds[1])) * 1.01))
    print("KERNEL_OK")
</pallas_src>

<mosaic_0001>
module attributes {stable_mosaic.version = 11 : i64} {
  func.func @_actor_trunk_kernel(%arg0: i32, %arg1: memref<128x128xf32, #tpu.memory_space<vmem>>, %arg2: memref<128x128xbf16, #tpu.memory_space<vmem>>, %arg3: memref<1x128xf32, #tpu.memory_space<vmem>>, %arg4: memref<128x128xbf16, #tpu.memory_space<vmem>>, %arg5: memref<1x128xf32, #tpu.memory_space<vmem>>, %arg6: memref<128x128xbf16, #tpu.memory_space<vmem>>, %arg7: memref<1x128xf32, #tpu.memory_space<vmem>>, %arg8: memref<128x128xf32, #tpu.memory_space<vmem>>) attributes {dimension_semantics = [#tpu.dimension_semantics<parallel>], iteration_bounds = array<i64: 2>, scalar_prefetch = 0 : i64, scratch_operands = 0 : i64, tpu.core_type = #tpu.core_type<tc>, window_params = [{transform_indices = @transform_0, window_bounds = array<i64: 128, 128>}, {pipeline_mode = #tpu.pipeline_mode<synchronous>, transform_indices = @transform_1, window_bounds = array<i64: 128, 128>}, {pipeline_mode = #tpu.pipeline_mode<synchronous>, transform_indices = @transform_2, window_bounds = array<i64: 1, 128>}, {pipeline_mode = #tpu.pipeline_mode<synchronous>, transform_indices = @transform_3, window_bounds = array<i64: 128, 128>}, {pipeline_mode = #tpu.pipeline_mode<synchronous>, transform_indices = @transform_4, window_bounds = array<i64: 1, 128>}, {pipeline_mode = #tpu.pipeline_mode<synchronous>, transform_indices = @transform_5, window_bounds = array<i64: 128, 128>}, {pipeline_mode = #tpu.pipeline_mode<synchronous>, transform_indices = @transform_6, window_bounds = array<i64: 1, 128>}, {transform_indices = @transform_7, window_bounds = array<i64: 128, 128>}]} {
    %c0 = arith.constant 0 : index
    %c0_0 = arith.constant 0 : index
    %0 = vector.load %arg1[%c0, %c0_0] : memref<128x128xf32, #tpu.memory_space<vmem>>, vector<128x128xf32>
    %1 = arith.truncf %0 : vector<128x128xf32> to vector<128x128xbf16>
    %c0_1 = arith.constant 0 : index
    %c0_2 = arith.constant 0 : index
    %2 = vector.load %arg2[%c0_1, %c0_2] : memref<128x128xbf16, #tpu.memory_space<vmem>>, vector<128x128xbf16>
    %c0_3 = arith.constant 0 : index
    %c0_4 = arith.constant 0 : index
    %3 = vector.load %arg3[%c0_3, %c0_4] : memref<1x128xf32, #tpu.memory_space<vmem>>, vector<1x128xf32>
    %cst = arith.constant dense<0.000000e+00> : vector<128x128xf32>
    %4 = tpu.matmul %1, %2, %cst {dimension_numbers = #tpu.dot_dimension_numbers<[1], [0], [0], [1], [0, 0, 1, 1], [], []>} : vector<128x128xbf16>, vector<128x128xbf16>, vector<128x128xf32> -> vector<128x128xf32>
    %5 = vector.broadcast %3 : vector<1x128xf32> to vector<128x128xf32>
    %6 = arith.addf %4, %5 : vector<128x128xf32>
    %cst_5 = arith.constant 0.000000e+00 : f32
    %7 = vector.broadcast %cst_5 : f32 to vector<128x128xf32>
    %8 = arith.maximumf %6, %7 : vector<128x128xf32>
    %9 = arith.truncf %8 : vector<128x128xf32> to vector<128x128xbf16>
    %c0_6 = arith.constant 0 : index
    %c0_7 = arith.constant 0 : index
    %10 = vector.load %arg4[%c0_6, %c0_7] : memref<128x128xbf16, #tpu.memory_space<vmem>>, vector<128x128xbf16>
    %c0_8 = arith.constant 0 : index
    %c0_9 = arith.constant 0 : index
    %11 = vector.load %arg5[%c0_8, %c0_9] : memref<1x128xf32, #tpu.memory_space<vmem>>, vector<1x128xf32>
    %cst_10 = arith.constant dense<0.000000e+00> : vector<128x128xf32>
    %12 = tpu.matmul %9, %10, %cst_10 {dimension_numbers = #tpu.dot_dimension_numbers<[1], [0], [0], [1], [0, 0, 1, 1], [], []>} : vector<128x128xbf16>, vector<128x128xbf16>, vector<128x128xf32> -> vector<128x128xf32>
    %13 = vector.broadcast %11 : vector<1x128xf32> to vector<128x128xf32>
    %14 = arith.addf %12, %13 : vector<128x128xf32>
    %cst_11 = arith.constant 0.000000e+00 : f32
    %15 = vector.broadcast %cst_11 : f32 to vector<128x128xf32>
    %16 = arith.maximumf %14, %15 : vector<128x128xf32>
    %17 = arith.truncf %16 : vector<128x128xf32> to vector<128x128xbf16>
    %c0_12 = arith.constant 0 : index
    %c0_13 = arith.constant 0 : index
    %18 = vector.load %arg6[%c0_12, %c0_13] : memref<128x128xbf16, #tpu.memory_space<vmem>>, vector<128x128xbf16>
    %c0_14 = arith.constant 0 : index
    %c0_15 = arith.constant 0 : index
    %19 = vector.load %arg7[%c0_14, %c0_15] : memref<1x128xf32, #tpu.memory_space<vmem>>, vector<1x128xf32>
    %cst_16 = arith.constant dense<0.000000e+00> : vector<128x128xf32>
    %20 = tpu.matmul %17, %18, %cst_16 {dimension_numbers = #tpu.dot_dimension_numbers<[1], [0], [0], [1], [0, 0, 1, 1], [], []>} : vector<128x128xbf16>, vector<128x128xbf16>, vector<128x128xf32> -> vector<128x128xf32>
    %21 = vector.broadcast %19 : vector<1x128xf32> to vector<128x128xf32>
    %22 = arith.addf %20, %21 : vector<128x128xf32>
    %23 = math.tanh %22 : vector<128x128xf32>
    %cst_17 = arith.constant 1.000000e+00 : f32
    %24 = vector.broadcast %cst_17 : f32 to vector<128x128xf32>
    %25 = arith.addf %23, %24 : vector<128x128xf32>
    %cst_18 = arith.constant 6.000000e+00 : f32
    %26 = vector.broadcast %cst_18 : f32 to vector<128x128xf32>
    %27 = arith.mulf %26, %25 : vector<128x128xf32>
    %cst_19 = arith.constant -1.000000e+01 : f32
    %28 = vector.broadcast %cst_19 : f32 to vector<128x128xf32>
    %29 = arith.addf %28, %27 : vector<128x128xf32>
    %30 = math.exp %29 : vector<128x128xf32>
    %31 = tpu.iota {dimensions = array<i32: 1>} : vector<128x128xi32>
    %c6_i32 = arith.constant 6 : i32
    %32 = vector.broadcast %c6_i32 : i32 to vector<128x128xi32>
    %33 = arith.cmpi slt, %31, %32 : vector<128x128xi32>
    %34 = arith.select %33, %22, %30 : vector<128x128xi1>, vector<128x128xf32>
    %c0_20 = arith.constant 0 : index
    %c0_21 = arith.constant 0 : index
    %35 = vector.load %arg8[%c0_20, %c0_21] : memref<128x128xf32, #tpu.memory_space<vmem>>, vector<128x128xf32>
    tpu.vector_store %arg8[%c0_20, %c0_21], %34 {strides = array<i32>} : memref<128x128xf32, #tpu.memory_space<vmem>>, vector<128x128xf32>,
    return
  }
  func.func @transform_0(%arg0: i32) -> (i32, i32) {
    %c0_i32 = arith.constant 0 : i32
    %c0_i32_0 = arith.constant 0 : i32
    return %arg0, %c0_i32 : i32, i32
  }
  func.func @transform_1(%arg0: i32) -> (i32, i32) {
    %c0_i32 = arith.constant 0 : i32
    %c0_i32_0 = arith.constant 0 : i32
    %c0_i32_1 = arith.constant 0 : i32
    return %c0_i32, %c0_i32_0 : i32, i32
  }
  func.func @transform_2(%arg0: i32) -> (i32, i32) {
    %c0_i32 = arith.constant 0 : i32
    %c0_i32_0 = arith.constant 0 : i32
    %c0_i32_1 = arith.constant 0 : i32
    return %c0_i32, %c0_i32_0 : i32, i32
  }
  func.func @transform_3(%arg0: i32) -> (i32, i32) {
    %c0_i32 = arith.constant 0 : i32
    %c0_i32_0 = arith.constant 0 : i32
    %c0_i32_1 = arith.constant 0 : i32
    return %c0_i32, %c0_i32_0 : i32, i32
  }
  func.func @transform_4(%arg0: i32) -> (i32, i32) {
    %c0_i32 = arith.constant 0 : i32
    %c0_i32_0 = arith.constant 0 : i32
    %c0_i32_1 = arith.constant 0 : i32
    return %c0_i32, %c0_i32_0 : i32, i32
  }
  func.func @transform_5(%arg0: i32) -> (i32, i32) {
    %c0_i32 = arith.constant 0 : i32
    %c0_i32_0 = arith.constant 0 : i32
    %c0_i32_1 = arith.constant 0 : i32
    return %c0_i32, %c0_i32_0 : i32, i32
  }
  func.func @transform_6(%arg0: i32) -> (i32, i32) {
    %c0_i32 = arith.constant 0 : i32
    %c0_i32_0 = arith.constant 0 : i32
    %c0_i32_1 = arith.constant 0 : i32
    return %c0_i32, %c0_i32_0 : i32, i32
  }
  func.func @transform_7(%arg0: i32) -> (i32, i32) {
    %c0_i32 = arith.constant 0 : i32
    %c0_i32_0 = arith.constant 0 : i32
    return %arg0, %c0_i32 : i32, i32
  }
}

</mosaic_0001>

<llo_original>
// kernel: actor_forward.1
$region0: #{actor_forward.1}
  #allocation0 [shape = 'u32[]', space=smem, size = 0x4, offset = 0x4, fixed_abs, tag = 'smem constant byte address 0x4 - core index']
  #allocation1 [shape = 'u32[72,128]{1,0:T(1,128)}', space=vmem, size = 0x9000, scoped, tag = 'internal scratch']
  %s0 = inlined_call_operand.vmem [shape: f32[256,128], index: 0, kind: input, shape index: {}]
  %s1 = inlined_call_operand.vmem [shape: bf16[128,128], index: 1, kind: input, shape index: {}]
  %s2 = inlined_call_operand.vmem [shape: f32[1,128], index: 2, kind: input, shape index: {}]
  %s3 = inlined_call_operand.vmem [shape: bf16[128,128], index: 3, kind: input, shape index: {}]
  %s4 = inlined_call_operand.vmem [shape: f32[1,128], index: 4, kind: input, shape index: {}]
  %s5 = inlined_call_operand.vmem [shape: bf16[128,128], index: 5, kind: input, shape index: {}]
  %s6 = inlined_call_operand.vmem [shape: f32[1,128], index: 6, kind: input, shape index: {}]
  %s7 = inlined_call_operand.vmem [shape: f32[256,128], index: 7, kind: output, shape index: {}]
  %s8 = sld [smem:[#allocation0]]
  $region61: #{actor_forward.1} parent=0
    _
  %s10 = ssub.s32 1, %s8
  %s11 = scalar_select 0, %s10, %s8
  loop: start=0, step=1, limit=4
  $region2: #{actor_forward.1} parent=0 // loop_pre_header
    _
  $region3: #{actor_forward.1} parent=0 // loop_header
    %s13 = sphi 0, %s17
    %p14 = scmp.ge.s32.totalorder %s13, 4
    %s23 = sphi 0, %s25
    %s26 = sphi 0, %s23
    %s27 = sphi 0, %s26
    %s43 = sphi 0, %s27
    %s47 = sphi 0, %s47
    %s49 = sphi 0, %s47
    %s50 = sphi 0, %s49
    %s64 = sphi 0, %s50
    %s68 = sphi 0, %s68
    %s70 = sphi 0, %s68
    %s71 = sphi 0, %s70
    %s85 = sphi 0, %s71
    %s89 = sphi 0, %s89
    %s91 = sphi 0, %s89
    %s92 = sphi 0, %s91
    %s106 = sphi 0, %s92
    %s110 = sphi 0, %s110
    %s112 = sphi 0, %s110
    %s113 = sphi 0, %s112
    %s127 = sphi 0, %s113
    %s131 = sphi 0, %s131
    %s133 = sphi 0, %s131
    %s134 = sphi 0, %s133
    %s148 = sphi 0, %s134
    %s152 = sphi 0, %s152
    %s154 = sphi 0, %s152
    %s155 = sphi 0, %s154
    %s169 = sphi 0, %s155
    %s175 = sphi 0, %s177
    %s178 = sphi 0, %s175
    %s179 = sphi 0, %s178
    %s195 = sphi 0, %s179
  $region4: #{actor_forward.1} parent=0 // loop_header_branch
    %16 = sbr.rel (%p14) target = $region8
  $region5: #{actor_forward.1} parent=0 // loop_body
    %s18 = ssub.s32 %s13, 1
    %s19 = ssub.s32 %s13, 2
    %s20 = sadd.s32 %s13, 1
    %s21 = ssub.s32 %s13, %s20
    %p22 = scmp.eq.s32.totalorder %s21, 0
    %s24 = sadd.s32 %s23, 1
    %s25 = scalar_select %p22, %s23, %s24
    %p28 = pneg %p22
    %p29 = scmp.eq.s32.totalorder %s13, 1
    %p30 = por %p28, %p29
    %p31 = scmp.ne.s32.totalorder %s23, %s26
    %p32 = scmp.eq.s32.totalorder %s13, 0
    %p33 = por %p31, %p32
    %p34 = scmp.ne.s32.totalorder %s23, %s26
    %p35 = scmp.eq.s32.totalorder %s18, 1
    %p36 = por %p34, %p35
    %p37 = scmp.ne.s32.totalorder %s26, %s27
    %p38 = scmp.eq.s32.totalorder %s18, 0
    %p39 = por %p37, %p38
    %p40 = scmp.ne.s32.totalorder %s26, %s27
    %p41 = scmp.eq.s32.totalorder %s19, 1
    %p42 = por %p40, %p41
    %p44 = scmp.ne.s32.totalorder %s27, %s43
    %p45 = scmp.eq.s32.totalorder %s19, 0
    %p46 = por %p44, %p45
    %s48 = sadd.s32 %s47, 1
    %p51 = scmp.eq.s32.totalorder %s13, 1
    %p52 = scmp.ne.s32.totalorder %s47, %s49
    %p53 = scmp.eq.s32.totalorder %s13, 0
    %p54 = por %p52, %p53
    %p55 = scmp.ne.s32.totalorder %s47, %s49
    %p56 = scmp.eq.s32.totalorder %s18, 1
    %p57 = por %p55, %p56
    %p58 = scmp.ne.s32.totalorder %s49, %s50
    %p59 = scmp.eq.s32.totalorder %s18, 0
    %p60 = por %p58, %p59
    %p61 = scmp.ne.s32.totalorder %s49, %s50
    %p62 = scmp.eq.s32.totalorder %s19, 1
    %p63 = por %p61, %p62
    %p65 = scmp.ne.s32.totalorder %s50, %s64
    %p66 = scmp.eq.s32.totalorder %s19, 0
    %p67 = por %p65, %p66
    %s69 = sadd.s32 %s68, 1
    %p72 = scmp.eq.s32.totalorder %s13, 1
    %p73 = scmp.ne.s32.totalorder %s68, %s70
    %p74 = scmp.eq.s32.totalorder %s13, 0
    %p75 = por %p73, %p74
    %p76 = scmp.ne.s32.totalorder %s68, %s70
    %p77 = scmp.eq.s32.totalorder %s18, 1
    %p78 = por %p76, %p77
    %p79 = scmp.ne.s32.totalorder %s70, %s71
    %p80 = scmp.eq.s32.totalorder %s18, 0
    %p81 = por %p79, %p80
    %p82 = scmp.ne.s32.totalorder %s70, %s71
    %p83 = scmp.eq.s32.totalorder %s19, 1
    %p84 = por %p82, %p83
    %p86 = scmp.ne.s32.totalorder %s71, %s85
    %p87 = scmp.eq.s32.totalorder %s19, 0
    %p88 = por %p86, %p87
    %s90 = sadd.s32 %s89, 1
    %p93 = scmp.eq.s32.totalorder %s13, 1
    %p94 = scmp.ne.s32.totalorder %s89, %s91
    %p95 = scmp.eq.s32.totalorder %s13, 0
    %p96 = por %p94, %p95
    %p97 = scmp.ne.s32.totalorder %s89, %s91
    %p98 = scmp.eq.s32.totalorder %s18, 1
    %p99 = por %p97, %p98
    %p100 = scmp.ne.s32.totalorder %s91, %s92
    %p101 = scmp.eq.s32.totalorder %s18, 0
    %p102 = por %p100, %p101
    %p103 = scmp.ne.s32.totalorder %s91, %s92
    %p104 = scmp.eq.s32.totalorder %s19, 1
    %p105 = por %p103, %p104
    %p107 = scmp.ne.s32.totalorder %s92, %s106
    %p108 = scmp.eq.s32.totalorder %s19, 0
    %p109 = por %p107, %p108
    %s111 = sadd.s32 %s110, 1
    %p114 = scmp.eq.s32.totalorder %s13, 1
    %p115 = scmp.ne.s32.totalorder %s110, %s112
    %p116 = scmp.eq.s32.totalorder %s13, 0
    %p117 = por %p115, %p116
    %p118 = scmp.ne.s32.totalorder %s110, %s112
    %p119 = scmp.eq.s32.totalorder %s18, 1
    %p120 = por %p118, %p119
    %p121 = scmp.ne.s32.totalorder %s112, %s113
    %p122 = scmp.eq.s32.totalorder %s18, 0
    %p123 = por %p121, %p122
    %p124 = scmp.ne.s32.totalorder %s112, %s113
    %p125 = scmp.eq.s32.totalorder %s19, 1
    %p126 = por %p124, %p125
    %p128 = scmp.ne.s32.totalorder %s113, %s127
    %p129 = scmp.eq.s32.totalorder %s19, 0
    %p130 = por %p128, %p129
    %s132 = sadd.s32 %s131, 1
    %p135 = scmp.eq.s32.totalorder %s13, 1
    %p136 = scmp.ne.s32.totalorder %s131, %s133
    %p137 = scmp.eq.s32.totalorder %s13, 0
    %p138 = por %p136, %p137
    %p139 = scmp.ne.s32.totalorder %s131, %s133
    %p140 = scmp.eq.s32.totalorder %s18, 1
    %p141 = por %p139, %p140
    %p142 = scmp.ne.s32.totalorder %s133, %s134
    %p143 = scmp.eq.s32.totalorder %s18, 0
    %p144 = por %p142, %p143
    %p145 = scmp.ne.s32.totalorder %s133, %s134
    %p146 = scmp.eq.s32.totalorder %s19, 1
    %p147 = por %p145, %p146
    %p149 = scmp.ne.s32.totalorder %s134, %s148
    %p150 = scmp.eq.s32.totalorder %s19, 0
    %p151 = por %p149, %p150
    %s153 = sadd.s32 %s152, 1
    %p156 = scmp.eq.s32.totalorder %s13, 1
    %p157 = scmp.ne.s32.totalorder %s152, %s154
    %p158 = scmp.eq.s32.totalorder %s13, 0
    %p159 = por %p157, %p158
    %p160 = scmp.ne.s32.totalorder %s152, %s154
    %p161 = scmp.eq.s32.totalorder %s18, 1
    %p162 = por %p160, %p161
    %p163 = scmp.ne.s32.totalorder %s154, %s155
    %p164 = scmp.eq.s32.totalorder %s18, 0
    %p165 = por %p163, %p164
    %p166 = scmp.ne.s32.totalorder %s154, %s155
    %p167 = scmp.eq.s32.totalorder %s19, 1
    %p168 = por %p166, %p167
    %p170 = scmp.ne.s32.totalorder %s155, %s169
    %p171 = scmp.eq.s32.totalorder %s19, 0
    %p172 = por %p170, %p171
    %s173 = ssub.s32 %s13, %s20
    %p174 = scmp.eq.s32.totalorder %s173, 0
    %s176 = sadd.s32 %s175, 1
    %s177 = scalar_select %p174, %s175, %s176
    %p180 = pneg %p174
    %p181 = scmp.eq.s32.totalorder %s13, 1
    %p182 = por %p180, %p181
    %p183 = scmp.ne.s32.totalorder %s175, %s178
    %p184 = scmp.eq.s32.totalorder %s13, 0
    %p185 = por %p183, %p184
    %p186 = scmp.ne.s32.totalorder %s175, %s178
    %p187 = scmp.eq.s32.totalorder %s18, 1
    %p188 = por %p186, %p187
    %p189 = scmp.ne.s32.totalorder %s178, %s179
    %p190 = scmp.eq.s32.totalorder %s18, 0
    %p191 = por %p189, %p190
    %p192 = scmp.ne.s32.totalorder %s178, %s179
    %p193 = scmp.eq.s32.totalorder %s19, 1
    %p194 = por %p192, %p193
    %p196 = scmp.ne.s32.totalorder %s179, %s195
    %p197 = scmp.eq.s32.totalorder %s19, 0
    %p198 = por %p196, %p197
    %p199 = scmp.le.s32.totalorder 1, %s13
    %p200 = scmp.lt.s32.totalorder %s13, 3
    %p201 = pnand %p199, %p200
    %p202 = pneg %p201
    // Predicated region
    $region9: #{actor_forward.1} parent=5 // pred_check
      _
    $region10: #{actor_forward.1} parent=5 // pred_check_branch
      %204 = sbr.rel (%p201) target = $region12
    $region11: #{actor_forward.1} parent=5 // pred_region
      %s205 = ssub.s32 %s13, 1
      // Predicated region
      $region13: #{actor_forward.1} parent=11 // pred_check
        %p206 = pneg %p60
      $region14: #{actor_forward.1} parent=11 // pred_check_branch
        %208 = sbr.rel (%p206) target = $region16
      $region15: #{actor_forward.1} parent=11 // pred_region
        _
      $region16: #{actor_forward.1} parent=11 // pred_fallthru
        _
      // Predicated region
      $region17: #{actor_forward.1} parent=11 // pred_check
        %p209 = pneg %p81
      $region18: #{actor_forward.1} parent=11 // pred_check_branch
        %211 = sbr.rel (%p209) target = $region20
      $region19: #{actor_forward.1} parent=11 // pred_region
        _
      $region20: #{actor_forward.1} parent=11 // pred_fallthru
        _
      // Predicated region
      $region21: #{actor_forward.1} parent=11 // pred_check
        %p212 = pneg %p102
      $region22: #{actor_forward.1} parent=11 // pred_check_branch
        %214 = sbr.rel (%p212) target = $region24
      $region23: #{actor_forward.1} parent=11 // pred_region
        _
      $region24: #{actor_forward.1} parent=11 // pred_fallthru
        _
      // Predicated region
      $region25: #{actor_forward.1} parent=11 // pred_check
        %p215 = pneg %p123
      $region26: #{actor_forward.1} parent=11 // pred_check_branch
        %217 = sbr.rel (%p215) target = $region28
      $region27: #{actor_forward.1} parent=11 // pred_region
        _
      $region28: #{actor_forward.1} parent=11 // pred_fallthru
        _
      // Predicated region
      $region29: #{actor_forward.1} parent=11 // pred_check
        %p218 = pneg %p144
      $region30: #{actor_forward.1} parent=11 // pred_check_branch
        %220 = sbr.rel (%p218) target = $region32
      $region31: #{actor_forward.1} parent=11 // pred_region
        _
      $region32: #{actor_forward.1} parent=11 // pred_fallthru
        _
      // Predicated region
      $region33: #{actor_forward.1} parent=11 // pred_check
        %p221 = pneg %p165
      $region34: #{actor_forward.1} parent=11 // pred_check_branch
        %223 = sbr.rel (%p221) target = $region36
      $region35: #{actor_forward.1} parent=11 // pred_region
        _
      $region36: #{actor_forward.1} parent=11 // pred_fallthru
        _
    $region12: #{actor_forward.1} parent=5 // pred_fallthru
      _
    %p224 = scmp.lt.s32.totalorder %s13, 2
    // Predicated region
    $region37: #{actor_forward.1} parent=5 // pred_check
      %p225 = pneg %p224
    $region38: #{actor_forward.1} parent=5 // pred_check_branch
      %227 = sbr.rel (%p225) target = $region40
    $region39: #{actor_forward.1} parent=5 // pred_region
      // Predicated region
      $region41: #{actor_forward.1} parent=39 // pred_check
        %p228 = pneg %p33
      $region42: #{actor_forward.1} parent=39 // pred_check_branch
        %230 = sbr.rel (%p228) target = $region44
      $region43: #{actor_forward.1} parent=39 // pred_region
        %s231 = smul.u32 16, %s13
        %p232 = scmp.lt.s32.totalorder %s231, 31
        %s233 = scalar_select %p232, %s231, 31
        %s234 = smul.addr %s233, 8
        %s235 = scalar_lea.vmem %s0, %s234
        %s236 = smul.u32 16, %s13
      $region44: #{actor_forward.1} parent=39 // pred_fallthru
        _
    $region40: #{actor_forward.1} parent=5 // pred_fallthru
      _
    %p237 = scmp.le.s32.totalorder 1, %s13
    %p238 = scmp.lt.s32.totalorder %s13, 3
    %p239 = pnand %p237, %p238
    %p240 = pneg %p239
    // Predicated region
    $region45: #{actor_forward.1} parent=5 // pred_check
      _
    $region46: #{actor_forward.1} parent=5 // pred_check_branch
      %242 = sbr.rel (%p239) target = $region48
    $region47: #{actor_forward.1} parent=5 // pred_region
      %s243 = ssub.s32 %s13, 1
      %s244 = smul.u32 16, %s18
      %p245 = scmp.lt.s32.totalorder %s244, 31
      %s246 = scalar_select %p245, %s244, 31
      %s247 = smul.addr %s246, 8
      %s248 = scalar_lea.vmem %s0, %s247
      %p249 = pneg %p39
      %p250 = pneg %p36
      %p251 = pneg %p60
      %p252 = pneg %p57
      %p253 = pneg %p81
      %p254 = pneg %p78
      %p255 = pneg %p102
      %p256 = pneg %p99
      %p257 = pneg %p123
      %p258 = pneg %p120
      %p259 = pneg %p144
      %p260 = pneg %p141
      %p261 = pneg %p165
      %p262 = pneg %p162
      %p263 = pneg %p191
      %p264 = pneg %p188
      %s265 = smul.u32 16, %s18
      %p266 = scmp.lt.s32.totalorder %s265, 31
      %s267 = scalar_select %p266, %s265, 31
      %s268 = smul.addr %s267, 8
      %s269 = scalar_lea.vmem %s7, %s268
      %s270 = smul.u32 16, %s18
      %p271 = scmp.lt.s32.totalorder %s270, 31
      %s272 = scalar_select %p271, %s270, 31
      %s273 = smul.addr %s272, 8
      %s274 = scalar_lea.vmem %s0, %s273
      %s275 = smul.u32 16, %s18
      %s276 = smul.u32 16, %s18
      %p277 = scmp.lt.s32.totalorder %s276, 31
      %s278 = scalar_select %p277, %s276, 31
      %s279 = smul.addr %s278, 8
      %s280 = scalar_lea.vmem %s7, %s279
      %s281 = smul.u32 16, %s18
      %v282 = vld [vmem:[%s274] sm:$0xff]
      %v283 = vld [vmem:[%s274 + $0x8] sm:$0xff]
      %v284 = vld [vmem:[%s274 + $0x10] sm:$0xff]
      %v285 = vld [vmem:[%s274 + $0x18] sm:$0xff]
      %v286 = vld [vmem:[%s274 + $0x20] sm:$0xff]
      %v287 = vld [vmem:[%s274 + $0x28] sm:$0xff]
      %v288 = vld [vmem:[%s274 + $0x30] sm:$0xff]
      %v289 = vld [vmem:[%s274 + $0x38] sm:$0xff]
      %v290 = vld [vmem:[%s274 + $0x40] sm:$0xff]
      %v291 = vld [vmem:[%s274 + $0x48] sm:$0xff]
      %v292 = vld [vmem:[%s274 + $0x50] sm:$0xff]
      %v293 = vld [vmem:[%s274 + $0x58] sm:$0xff]
      %v294 = vld [vmem:[%s274 + $0x60] sm:$0xff]
      %v295 = vld [vmem:[%s274 + $0x68] sm:$0xff]
      %v296 = vld [vmem:[%s274 + $0x70] sm:$0xff]
      %v297 = vld [vmem:[%s274 + $0x78] sm:$0xff]
      %v298 = vpack.c.bf16 %v283, %v282
      %v299 = vpack.c.bf16 %v285, %v284
      %v300 = vpack.c.bf16 %v287, %v286
      %v301 = vpack.c.bf16 %v289, %v288
      %v302 = vpack.c.bf16 %v291, %v290
      %v303 = vpack.c.bf16 %v293, %v292
      %v304 = vpack.c.bf16 %v295, %v294
      %v305 = vpack.c.bf16 %v297, %v296
      %v306 = vld [vmem:[%s1] sm:$0xf]
      %v307 = vld [vmem:[%s1 + $0x4] sm:$0xf]
      %v308 = vld [vmem:[%s1 + $0x8] sm:$0xf]
      %v309 = vld [vmem:[%s1 + $0xc] sm:$0xf]
      %v310 = vld [vmem:[%s1 + $0x10] sm:$0xf]
      %v311 = vld [vmem:[%s1 + $0x14] sm:$0xf]
      %v312 = vld [vmem:[%s1 + $0x18] sm:$0xf]
      %v313 = vld [vmem:[%s1 + $0x1c] sm:$0xf]
      %v314 = vld [vmem:[%s1 + $0x20] sm:$0xf]
      %v315 = vld [vmem:[%s1 + $0x24] sm:$0xf]
      %v316 = vld [vmem:[%s1 + $0x28] sm:$0xf]
      %v317 = vld [vmem:[%s1 + $0x2c] sm:$0xf]
      %v318 = vld [vmem:[%s1 + $0x30] sm:$0xf]
      %v319 = vld [vmem:[%s1 + $0x34] sm:$0xf]
      %v320 = vld [vmem:[%s1 + $0x38] sm:$0xf]
      %v321 = vld [vmem:[%s1 + $0x3c] sm:$0xf]
      %v322 = vld [vmem:[%s2] sm:$0x1]
      %v324 = vperm.slane %v322, 0
      %v342 = vunpack.c.l.b16 %v306
      %v343 = vunpack.c.l.b16 %v307
      %v344 = vunpack.c.l.b16 %v308
      %v345 = vunpack.c.l.b16 %v309
      %v346 = vunpack.c.l.b16 %v310
      %v347 = vunpack.c.l.b16 %v311
      %v348 = vunpack.c.l.b16 %v312
      %v349 = vunpack.c.l.b16 %v313
      %v350 = vunpack.c.l.b16 %v314
      %v351 = vunpack.c.l.b16 %v315
      %v352 = vunpack.c.l.b16 %v316
      %v353 = vunpack.c.l.b16 %v317
      %v354 = vunpack.c.l.b16 %v318
      %v355 = vunpack.c.l.b16 %v319
      %v356 = vunpack.c.l.b16 %v320
      %v357 = vunpack.c.l.b16 %v321
      %v358 = vpack.c.b16 %v343, %v342
      %v359 = vpack.c.b16 %v345, %v344
      %v360 = vpack.c.b16 %v347, %v346
      %v361 = vpack.c.b16 %v349, %v348
      %v362 = vpack.c.b16 %v351, %v350
      %v363 = vpack.c.b16 %v353, %v352
      %v364 = vpack.c.b16 %v355, %v354
      %v365 = vpack.c.b16 %v357, %v356
      %374 = vmatpush.bf16.msra.mxu0 %v365
      %375 = vmatpush.bf16.msra.mxu0 %v364
      %376 = vmatpush.bf16.msra.mxu0 %v363
      %377 = vmatpush.bf16.msra.mxu0 %v362
      %378 = vmatpush.bf16.msra.mxu0 %v361
      %379 = vmatpush.bf16.msra.mxu0 %v360
      %380 = vmatpush.bf16.msra.mxu0 %v359
      %381 = vmatpush.bf16.msra.mxu0 %v358
      %382 = vmatmul.bf16.gmra.mxu0 %v298
      %v383 = vpop.f32.mrf.mxu0
      %v384 = vadd.f32 %v324, %v383
      %v385 = vpop.f32.mrf.mxu0
      %v386 = vadd.f32 %v324, %v385
      %387 = vmatmul.bf16.gmra.mxu0 %v299
      %v388 = vpop.f32.mrf.mxu0
      %v389 = vadd.f32 %v324, %v388
      %v390 = vpop.f32.mrf.mxu0
      %v391 = vadd.f32 %v324, %v390
      %392 = vmatmul.bf16.gmra.mxu0 %v300
      %v393 = vpop.f32.mrf.mxu0
      %v394 = vadd.f32 %v324, %v393
      %v395 = vpop.f32.mrf.mxu0
      %v396 = vadd.f32 %v324, %v395
      %397 = vmatmul.bf16.gmra.mxu0 %v301
      %v398 = vpop.f32.mrf.mxu0
      %v399 = vadd.f32 %v324, %v398
      %v400 = vpop.f32.mrf.mxu0
      %v401 = vadd.f32 %v324, %v400
      %402 = vmatmul.bf16.gmra.mxu0 %v302
      %v403 = vpop.f32.mrf.mxu0
      %v404 = vadd.f32 %v324, %v403
      %v405 = vpop.f32.mrf.mxu0
      %v406 = vadd.f32 %v324, %v405
      %407 = vmatmul.bf16.gmra.mxu0 %v303
      %v408 = vpop.f32.mrf.mxu0
      %v409 = vadd.f32 %v324, %v408
      %v410 = vpop.f32.mrf.mxu0
      %v411 = vadd.f32 %v324, %v410
      %412 = vmatmul.bf16.gmra.mxu0 %v304
      %v413 = vpop.f32.mrf.mxu0
      %v414 = vadd.f32 %v324, %v413
      %v415 = vpop.f32.mrf.mxu0
      %v416 = vadd.f32 %v324, %v415
      %417 = vmatmul.bf16.gmra.mxu0 %v305
      %v418 = vpop.f32.mrf.mxu0
      %v419 = vadd.f32 %v324, %v418
      %v420 = vpop.f32.mrf.mxu0
      %v421 = vadd.f32 %v324, %v420
      %422 = vdwg.mxu0
      %v423 = vmax.f32 %v384, 0.0
      %v424 = vmax.f32 %v386, 0.0
      %v425 = vmax.f32 %v389, 0.0
      %v426 = vmax.f32 %v391, 0.0
      %v427 = vmax.f32 %v394, 0.0
      %v428 = vmax.f32 %v396, 0.0
      %v429 = vmax.f32 %v399, 0.0
      %v430 = vmax.f32 %v401, 0.0
      %v431 = vmax.f32 %v404, 0.0
      %v432 = vmax.f32 %v406, 0.0
      %v433 = vmax.f32 %v409, 0.0
      %v434 = vmax.f32 %v411, 0.0
      %v435 = vmax.f32 %v414, 0.0
      %v436 = vmax.f32 %v416, 0.0
      %v437 = vmax.f32 %v419, 0.0
      %v438 = vmax.f32 %v421, 0.0
      %v439 = vpack.c.bf16 %v424, %v423
      %v440 = vpack.c.bf16 %v426, %v425
      %v441 = vpack.c.bf16 %v428, %v427
      %v442 = vpack.c.bf16 %v430, %v429
      %v443 = vpack.c.bf16 %v432, %v431
      %v444 = vpack.c.bf16 %v434, %v433
      %v445 = vpack.c.bf16 %v436, %v435
      %v446 = vpack.c.bf16 %v438, %v437
      %v447 = vld [vmem:[%s3] sm:$0xf]
      %v448 = vld [vmem:[%s3 + $0x4] sm:$0xf]
      %v449 = vld [vmem:[%s3 + $0x8] sm:$0xf]
      %v450 = vld [vmem:[%s3 + $0xc] sm:$0xf]
      %v451 = vld [vmem:[%s3 + $0x10] sm:$0xf]
      %v452 = vld [vmem:[%s3 + $0x14] sm:$0xf]
      %v453 = vld [vmem:[%s3 + $0x18] sm:$0xf]
      %v454 = vld [vmem:[%s3 + $0x1c] sm:$0xf]
      %v455 = vld [vmem:[%s3 + $0x20] sm:$0xf]
      %v456 = vld [vmem:[%s3 + $0x24] sm:$0xf]
      %v457 = vld [vmem:[%s3 + $0x28] sm:$0xf]
      %v458 = vld [vmem:[%s3 + $0x2c] sm:$0xf]
      %v459 = vld [vmem:[%s3 + $0x30] sm:$0xf]
      %v460 = vld [vmem:[%s3 + $0x34] sm:$0xf]
      %v461 = vld [vmem:[%s3 + $0x38] sm:$0xf]
      %v462 = vld [vmem:[%s3 + $0x3c] sm:$0xf]
      %v463 = vld [vmem:[%s4] sm:$0x1]
      %v465 = vperm.slane %v463, 0
      %v483 = vunpack.c.l.b16 %v447
      %v484 = vunpack.c.l.b16 %v448
      %v485 = vunpack.c.l.b16 %v449
      %v486 = vunpack.c.l.b16 %v450
      %v487 = vunpack.c.l.b16 %v451
      %v488 = vunpack.c.l.b16 %v452
      %v489 = vunpack.c.l.b16 %v453
      %v490 = vunpack.c.l.b16 %v454
      %v491 = vunpack.c.l.b16 %v455
      %v492 = vunpack.c.l.b16 %v456
      %v493 = vunpack.c.l.b16 %v457
      %v494 = vunpack.c.l.b16 %v458
      %v495 = vunpack.c.l.b16 %v459
      %v496 = vunpack.c.l.b16 %v460
      %v497 = vunpack.c.l.b16 %v461
      %v498 = vunpack.c.l.b16 %v462
      %v499 = vpack.c.b16 %v484, %v483
      %v500 = vpack.c.b16 %v486, %v485
      %v501 = vpack.c.b16 %v488, %v487
      %v502 = vpack.c.b16 %v490, %v489
      %v503 = vpack.c.b16 %v492, %v491
      %v504 = vpack.c.b16 %v494, %v493
      %v505 = vpack.c.b16 %v496, %v495
      %v506 = vpack.c.b16 %v498, %v497
      %515 = vmatpush.bf16.msra.mxu0 %v506
      %516 = vmatpush.bf16.msra.mxu0 %v505
      %517 = vmatpush.bf16.msra.mxu0 %v504
      %518 = vmatpush.bf16.msra.mxu0 %v503
      %519 = vmatpush.bf16.msra.mxu0 %v502
      %520 = vmatpush.bf16.msra.mxu0 %v501
      %521 = vmatpush.bf16.msra.mxu0 %v500
      %522 = vmatpush.bf16.msra.mxu0 %v499
      %523 = vmatmul.bf16.gmra.mxu0 %v439
      %v524 = vpop.f32.mrf.mxu0
      %v525 = vadd.f32 %v465, %v524
      %v526 = vpop.f32.mrf.mxu0
      %v527 = vadd.f32 %v465, %v526
      %528 = vmatmul.bf16.gmra.mxu0 %v440
      %v529 = vpop.f32.mrf.mxu0
      %v530 = vadd.f32 %v465, %v529
      %v531 = vpop.f32.mrf.mxu0
      %v532 = vadd.f32 %v465, %v531
      %533 = vmatmul.bf16.gmra.mxu0 %v441
      %v534 = vpop.f32.mrf.mxu0
      %v535 = vadd.f32 %v465, %v534
      %v536 = vpop.f32.mrf.mxu0
      %v537 = vadd.f32 %v465, %v536
      %538 = vmatmul.bf16.gmra.mxu0 %v442
      %v539 = vpop.f32.mrf.mxu0
      %v540 = vadd.f32 %v465, %v539
      %v541 = vpop.f32.mrf.mxu0
      %v542 = vadd.f32 %v465, %v541
      %543 = vmatmul.bf16.gmra.mxu0 %v443
      %v544 = vpop.f32.mrf.mxu0
      %v545 = vadd.f32 %v465, %v544
      %v546 = vpop.f32.mrf.mxu0
      %v547 = vadd.f32 %v465, %v546
      %548 = vmatmul.bf16.gmra.mxu0 %v444
      %v549 = vpop.f32.mrf.mxu0
      %v550 = vadd.f32 %v465, %v549
      %v551 = vpop.f32.mrf.mxu0
      %v552 = vadd.f32 %v465, %v551
      %553 = vmatmul.bf16.gmra.mxu0 %v445
      %v554 = vpop.f32.mrf.mxu0
      %v555 = vadd.f32 %v465, %v554
      %v556 = vpop.f32.mrf.mxu0
      %v557 = vadd.f32 %v465, %v556
      %558 = vmatmul.bf16.gmra.mxu0 %v446
      %v559 = vpop.f32.mrf.mxu0
      %v560 = vadd.f32 %v465, %v559
      %v561 = vpop.f32.mrf.mxu0
      %v562 = vadd.f32 %v465, %v561
      %563 = vdwg.mxu0
      %v564 = vmax.f32 %v525, 0.0
      %v565 = vmax.f32 %v527, 0.0
      %v566 = vmax.f32 %v530, 0.0
      %v567 = vmax.f32 %v532, 0.0
      %v568 = vmax.f32 %v535, 0.0
      %v569 = vmax.f32 %v537, 0.0
      %v570 = vmax.f32 %v540, 0.0
      %v571 = vmax.f32 %v542, 0.0
      %v572 = vmax.f32 %v545, 0.0
      %v573 = vmax.f32 %v547, 0.0
      %v574 = vmax.f32 %v550, 0.0
      %v575 = vmax.f32 %v552, 0.0
      %v576 = vmax.f32 %v555, 0.0
      %v577 = vmax.f32 %v557, 0.0
      %v578 = vmax.f32 %v560, 0.0
      %v579 = vmax.f32 %v562, 0.0
      %v580 = vpack.c.bf16 %v565, %v564
      %v581 = vpack.c.bf16 %v567, %v566
      %v582 = vpack.c.bf16 %v569, %v568
      %v583 = vpack.c.bf16 %v571, %v570
      %v584 = vpack.c.bf16 %v573, %v572
      %v585 = vpack.c.bf16 %v575, %v574
      %v586 = vpack.c.bf16 %v577, %v576
      %v587 = vpack.c.bf16 %v579, %v578
      %v588 = vld [vmem:[%s5] sm:$0xf]
      %v589 = vld [vmem:[%s5 + $0x4] sm:$0xf]
      %v590 = vld [vmem:[%s5 + $0x8] sm:$0xf]
      %v591 = vld [vmem:[%s5 + $0xc] sm:$0xf]
      %v592 = vld [vmem:[%s5 + $0x10] sm:$0xf]
      %v593 = vld [vmem:[%s5 + $0x14] sm:$0xf]
      %v594 = vld [vmem:[%s5 + $0x18] sm:$0xf]
      %v595 = vld [vmem:[%s5 + $0x1c] sm:$0xf]
      %v596 = vld [vmem:[%s5 + $0x20] sm:$0xf]
      %v597 = vld [vmem:[%s5 + $0x24] sm:$0xf]
      %v598 = vld [vmem:[%s5 + $0x28] sm:$0xf]
      %v599 = vld [vmem:[%s5 + $0x2c] sm:$0xf]
      %v600 = vld [vmem:[%s5 + $0x30] sm:$0xf]
      %v601 = vld [vmem:[%s5 + $0x34] sm:$0xf]
      %v602 = vld [vmem:[%s5 + $0x38] sm:$0xf]
      %v603 = vld [vmem:[%s5 + $0x3c] sm:$0xf]
      %v604 = vld [vmem:[%s6] sm:$0x1]
      %v606 = vperm.slane %v604, 0
      %v624 = vunpack.c.l.b16 %v588
      %v625 = vunpack.c.l.b16 %v589
      %v626 = vunpack.c.l.b16 %v590
      %v627 = vunpack.c.l.b16 %v591
      %v628 = vunpack.c.l.b16 %v592
      %v629 = vunpack.c.l.b16 %v593
      %v630 = vunpack.c.l.b16 %v594
      %v631 = vunpack.c.l.b16 %v595
      %v632 = vunpack.c.l.b16 %v596
      %v633 = vunpack.c.l.b16 %v597
      %v634 = vunpack.c.l.b16 %v598
      %v635 = vunpack.c.l.b16 %v599
      %v636 = vunpack.c.l.b16 %v600
      %v637 = vunpack.c.l.b16 %v601
      %v638 = vunpack.c.l.b16 %v602
      %v639 = vunpack.c.l.b16 %v603
      %v640 = vpack.c.b16 %v625, %v624
      %v641 = vpack.c.b16 %v627, %v626
      %v642 = vpack.c.b16 %v629, %v628
      %v643 = vpack.c.b16 %v631, %v630
      %v644 = vpack.c.b16 %v633, %v632
      %v645 = vpack.c.b16 %v635, %v634
      %v646 = vpack.c.b16 %v637, %v636
      %v647 = vpack.c.b16 %v639, %v638
      %656 = vmatpush.bf16.msra.mxu0 %v647
      %657 = vmatpush.bf16.msra.mxu0 %v646
      %658 = vmatpush.bf16.msra.mxu0 %v645
      %659 = vmatpush.bf16.msra.mxu0 %v644
      %660 = vmatpush.bf16.msra.mxu0 %v643
      %661 = vmatpush.bf16.msra.mxu0 %v642
      %662 = vmatpush.bf16.msra.mxu0 %v641
      %663 = vmatpush.bf16.msra.mxu0 %v640
      %664 = vmatmul.bf16.gmra.mxu0 %v580
      %v665 = vpop.f32.mrf.mxu0
      %v666 = vadd.f32 %v606, %v665
      %v667 = vpop.f32.mrf.mxu0
      %v668 = vadd.f32 %v606, %v667
      %669 = vmatmul.bf16.gmra.mxu0 %v581
      %v670 = vpop.f32.mrf.mxu0
      %v671 = vadd.f32 %v606, %v670
      %v672 = vpop.f32.mrf.mxu0
      %v673 = vadd.f32 %v606, %v672
      %674 = vmatmul.bf16.gmra.mxu0 %v582
      %v675 = vpop.f32.mrf.mxu0
      %v676 = vadd.f32 %v606, %v675
      %v677 = vpop.f32.mrf.mxu0
      %v678 = vadd.f32 %v606, %v677
      %679 = vmatmul.bf16.gmra.mxu0 %v583
      %v680 = vpop.f32.mrf.mxu0
      %v681 = vadd.f32 %v606, %v680
      %v682 = vpop.f32.mrf.mxu0
      %v683 = vadd.f32 %v606, %v682
      %684 = vmatmul.bf16.gmra.mxu0 %v584
      %v685 = vpop.f32.mrf.mxu0
      %v686 = vadd.f32 %v606, %v685
      %v687 = vpop.f32.mrf.mxu0
      %v688 = vadd.f32 %v606, %v687
      %689 = vmatmul.bf16.gmra.mxu0 %v585
      %v690 = vpop.f32.mrf.mxu0
      %v691 = vadd.f32 %v606, %v690
      %v692 = vpop.f32.mrf.mxu0
      %v693 = vadd.f32 %v606, %v692
      %694 = vmatmul.bf16.gmra.mxu0 %v586
      %v695 = vpop.f32.mrf.mxu0
      %v696 = vadd.f32 %v606, %v695
      %v697 = vpop.f32.mrf.mxu0
      %v698 = vadd.f32 %v606, %v697
      %699 = vmatmul.bf16.gmra.mxu0 %v587
      %v700 = vpop.f32.mrf.mxu0
      %v701 = vadd.f32 %v606, %v700
      %v702 = vpop.f32.mrf.mxu0
      %v703 = vadd.f32 %v606, %v702
      %704 = vdwg.mxu0
      %v705 = vtanh.pop %v666
      %v706 = vtanh.pop %v668
      %v707 = vtanh.pop %v671
      %v708 = vtanh.pop %v673
      %v709 = vtanh.pop %v676
      %v710 = vtanh.pop %v678
      %v711 = vtanh.pop %v681
      %v712 = vtanh.pop %v683
      %v713 = vtanh.pop %v686
      %v714 = vtanh.pop %v688
      %v715 = vtanh.pop %v691
      %v716 = vtanh.pop %v693
      %v717 = vtanh.pop %v696
      %v718 = vtanh.pop %v698
      %v719 = vtanh.pop %v701
      %v720 = vtanh.pop %v703
      %v721 = vadd.f32 %v705, 1.0
      %v722 = vadd.f32 %v706, 1.0
      %v723 = vadd.f32 %v707, 1.0
      %v724 = vadd.f32 %v708, 1.0
      %v725 = vadd.f32 %v709, 1.0
      %v726 = vadd.f32 %v710, 1.0
      %v727 = vadd.f32 %v711, 1.0
      %v728 = vadd.f32 %v712, 1.0
      %v729 = vadd.f32 %v713, 1.0
      %v730 = vadd.f32 %v714, 1.0
      %v731 = vadd.f32 %v715, 1.0
      %v732 = vadd.f32 %v716, 1.0
      %v733 = vadd.f32 %v717, 1.0
      %v734 = vadd.f32 %v718, 1.0
      %v735 = vadd.f32 %v719, 1.0
      %v736 = vadd.f32 %v720, 1.0
      %v737 = vmul.f32 %v721, 6.0
      %v738 = vmul.f32 %v722, 6.0
      %v739 = vmul.f32 %v723, 6.0
      %v740 = vmul.f32 %v724, 6.0
      %v741 = vmul.f32 %v725, 6.0
      %v742 = vmul.f32 %v726, 6.0
      %v743 = vmul.f32 %v727, 6.0
      %v744 = vmul.f32 %v728, 6.0
      %v745 = vmul.f32 %v729, 6.0
      %v746 = vmul.f32 %v730, 6.0
      %v747 = vmul.f32 %v731, 6.0
      %v748 = vmul.f32 %v732, 6.0
      %v749 = vmul.f32 %v733, 6.0
      %v750 = vmul.f32 %v734, 6.0
      %v751 = vmul.f32 %v735, 6.0
      %v752 = vmul.f32 %v736, 6.0
      %v753 = vadd.f32 %v737, -10.0
      %v754 = vadd.f32 %v738, -10.0
      %v755 = vadd.f32 %v739, -10.0
      %v756 = vadd.f32 %v740, -10.0
      %v757 = vadd.f32 %v741, -10.0
      %v758 = vadd.f32 %v742, -10.0
      %v759 = vadd.f32 %v743, -10.0
      %v760 = vadd.f32 %v744, -10.0
      %v761 = vadd.f32 %v745, -10.0
      %v762 = vadd.f32 %v746, -10.0
      %v763 = vadd.f32 %v747, -10.0
      %v764 = vadd.f32 %v748, -10.0
      %v765 = vadd.f32 %v749, -10.0
      %v766 = vadd.f32 %v750, -10.0
      %v767 = vadd.f32 %v751, -10.0
      %v768 = vadd.f32 %v752, -10.0
      %v769 = vmul.f32 %v753, 1.442695
      %v770 = vpow.pop %v769
      %v771 = vmul.f32 %v754, 1.442695
      %v772 = vpow.pop %v771
      %v773 = vmul.f32 %v755, 1.442695
      %v774 = vpow.pop %v773
      %v775 = vmul.f32 %v756, 1.442695
      %v776 = vpow.pop %v775
      %v777 = vmul.f32 %v757, 1.442695
      %v778 = vpow.pop %v777
      %v779 = vmul.f32 %v758, 1.442695
      %v780 = vpow.pop %v779
      %v781 = vmul.f32 %v759, 1.442695
      %v782 = vpow.pop %v781
      %v783 = vmul.f32 %v760, 1.442695
      %v784 = vpow.pop %v783
      %v785 = vmul.f32 %v761, 1.442695
      %v786 = vpow.pop %v785
      %v787 = vmul.f32 %v762, 1.442695
      %v788 = vpow.pop %v787
      %v789 = vmul.f32 %v763, 1.442695
      %v790 = vpow.pop %v789
      %v791 = vmul.f32 %v764, 1.442695
      %v792 = vpow.pop %v791
      %v793 = vmul.f32 %v765, 1.442695
      %v794 = vpow.pop %v793
      %v795 = vmul.f32 %v766, 1.442695
      %v796 = vpow.pop %v795
      %v797 = vmul.f32 %v767, 1.442695
      %v798 = vpow.pop %v797
      %v799 = vmul.f32 %v768, 1.442695
      %v800 = vpow.pop %v799
      %v801 = vlaneseq
      %v802 = vand.u32 %v801, 127
      %vm803 = vcmp.lt.s32.totalorder %v802, 6
      %v804 = vsel %vm803, %v666, %v770
      %v805 = vsel %vm803, %v668, %v772
      %v806 = vsel %vm803, %v671, %v774
      %v807 = vsel %vm803, %v673, %v776
      %v808 = vsel %vm803, %v676, %v778
      %v809 = vsel %vm803, %v678, %v780
      %v810 = vsel %vm803, %v681, %v782
      %v811 = vsel %vm803, %v683, %v784
      %v812 = vsel %vm803, %v686, %v786
      %v813 = vsel %vm803, %v688, %v788
      %v814 = vsel %vm803, %v691, %v790
      %v815 = vsel %vm803, %v693, %v792
      %v816 = vsel %vm803, %v696, %v794
      %v817 = vsel %vm803, %v698, %v796
      %v818 = vsel %vm803, %v701, %v798
      %v819 = vsel %vm803, %v703, %v800
      %820 = vst [vmem:[%s280] sm:$0xff] %v804
      %821 = vst [vmem:[%s280 + $0x8] sm:$0xff] %v805
      %822 = vst [vmem:[%s280 + $0x10] sm:$0xff] %v806
      %823 = vst [vmem:[%s280 + $0x18] sm:$0xff] %v807
      %824 = vst [vmem:[%s280 + $0x20] sm:$0xff] %v808
      %825 = vst [vmem:[%s280 + $0x28] sm:$0xff] %v809
      %826 = vst [vmem:[%s280 + $0x30] sm:$0xff] %v810
      %827 = vst [vmem:[%s280 + $0x38] sm:$0xff] %v811
      %828 = vst [vmem:[%s280 + $0x40] sm:$0xff] %v812
      %829 = vst [vmem:[%s280 + $0x48] sm:$0xff] %v813
      %830 = vst [vmem:[%s280 + $0x50] sm:$0xff] %v814
      %831 = vst [vmem:[%s280 + $0x58] sm:$0xff] %v815
      %832 = vst [vmem:[%s280 + $0x60] sm:$0xff] %v816
      %833 = vst [vmem:[%s280 + $0x68] sm:$0xff] %v817
      %834 = vst [vmem:[%s280 + $0x70] sm:$0xff] %v818
      %835 = vst [vmem:[%s280 + $0x78] sm:$0xff] %v819
      %s836 = smul.u32 16, %s18
      %p837 = scmp.lt.s32.totalorder %s836, 31
      %s838 = scalar_select %p837, %s836, 31
      %s839 = smul.addr %s838, 8
      %s840 = scalar_lea.vmem %s7, %s839
      // Predicated region
      $region49: #{actor_forward.1} parent=47 // pred_check
        %p841 = pneg %p188
      $region50: #{actor_forward.1} parent=47 // pred_check_branch
        %843 = sbr.rel (%p841) target = $region52
      $region51: #{actor_forward.1} parent=47 // pred_region
        %s844 = smul.u32 16, %s18
      $region52: #{actor_forward.1} parent=47 // pred_fallthru
        _
    $region48: #{actor_forward.1} parent=5 // pred_fallthru
      _
    %p845 = scmp.le.s32.totalorder 2, %s13
    // Predicated region
    $region53: #{actor_forward.1} parent=5 // pred_check
      %p846 = pneg %p845
    $region54: #{actor_forward.1} parent=5 // pred_check_branch
      %848 = sbr.rel (%p846) target = $region56
    $region55: #{actor_forward.1} parent=5 // pred_region
      %s849 = ssub.s32 %s13, 2
      // Predicated region
      $region57: #{actor_forward.1} parent=55 // pred_check
        %p850 = pneg %p194
      $region58: #{actor_forward.1} parent=55 // pred_check_branch
        %852 = sbr.rel (%p850) target = $region60
      $region59: #{actor_forward.1} parent=55 // pred_region
        %s853 = smul.u32 16, %s19
        %p854 = scmp.lt.s32.totalorder %s853, 31
        %s855 = scalar_select %p854, %s853, 31
        %s856 = smul.addr %s855, 8
        %s857 = scalar_lea.vmem %s7, %s856
      $region60: #{actor_forward.1} parent=55 // pred_fallthru
        _
    $region56: #{actor_forward.1} parent=5 // pred_fallthru
      _
  $region6: #{actor_forward.1} parent=0 // loop_footer
    %s17 = sadd.s32 1, %s13
  $region7: #{actor_forward.1} parent=0 // loop_footer_branch
    %12 = sbr.rel target = $region3
  $region8: #{actor_forward.1} parent=0 // loop_exit
    _

</llo_original>
